<compile_context>
chip_gen: v5e
topology: v5e:2x2
jax: 0.10.0
libtpu: 0.0.40
codegen_flags: <defaults>
</compile_context>

<pallas_src>
import warnings

import jax
import jax.numpy as jnp
from jax.experimental import pallas as pl
from jax.experimental.pallas import tpu as pltpu

# Donation is best-effort; if XLA cannot reuse the donated buffer it falls back
# to an internal copy and emits this harmless warning.
warnings.filterwarnings("ignore", message="Some donated buffers were not usable")

_TARGET_BLOCK_BYTES = 2 * 1024 * 1024        # ~2 MiB per block
_LANE_CANDIDATES = (4096, 2048, 1024, 512, 256, 128)
_VMEM_LIMIT_BYTES = 32 * 1024 * 1024         # safe on v5e / v6e / v7x


def _copy_kernel(x_ref, o_ref):
    # My_model.forward is `return x` -> a pure tile copy.
    o_ref[...] = x_ref[...]


def _sublane_multiple(dtype):
    # f32 -> 8 sublanes, bf16 -> 16, int8/fp8 -> 32 (packed sublanes).
    return max(8, 32 // jnp.dtype(dtype).itemsize)


def _pick_tile_rows(rows, cols, itemsize, sub):
    """Largest legal row-tile giving ~_TARGET_BLOCK_BYTES per block."""
    max_rows = max(sub, _TARGET_BLOCK_BYTES // (cols * itemsize))
    if rows <= max_rows:
        return rows                           # full extent: always a legal block dim
    best = (max_rows // sub) * sub
    # Prefer a divisor of `rows` so every block is full (no masked boundary tile).
    for cand in range(best, 0, -sub):
        if rows % cand == 0:
            return cand
    return best                               # ragged last tile handled via cdiv grid


def _copy_2d(x2d, tile_rows):
    rows, cols = x2d.shape
    grid = (pl.cdiv(rows, tile_rows),)
    return pl.pallas_call(
        _copy_kernel,
        out_shape=jax.ShapeDtypeStruct((rows, cols), x2d.dtype),
        grid=grid,
        in_specs=[pl.BlockSpec((tile_rows, cols), lambda i: (i, 0))],
        out_specs=pl.BlockSpec((tile_rows, cols), lambda i: (i, 0)),
        input_output_aliases={0: 0},          # identity: reuse the input buffer
        compiler_params=pltpu.CompilerParams(
            dimension_semantics=("parallel",),
            vmem_limit_bytes=_VMEM_LIMIT_BYTES,
        ),
    )(x2d)


def _forward_impl(x):
    orig_shape = x.shape
    n = x.size
    if n == 0:
        return x

    dtype = x.dtype
    sub = _sublane_multiple(dtype)
    itemsize = jnp.dtype(dtype).itemsize

    # Fast path: element count divisible by a lane-dense width -> reshape in
    # place (bitcast), no padding, no extra HBM passes.
    cols = next((c for c in _LANE_CANDIDATES if n % c == 0), None)
    if cols is not None:
        rows = n // cols
        out2d = _copy_2d(x.reshape(rows, cols),
                         _pick_tile_rows(rows, cols, itemsize, sub))
        return out2d.reshape(orig_shape)

    # Slow path (rare: n not a multiple of 128): minimal pad to a legal slab.
    cols = 512
    rows = -(-n // cols)
    rows = -(-rows // sub) * sub
    flat = jnp.pad(x.reshape(-1), (0, rows * cols - n))
    out2d = _copy_2d(flat.reshape(rows, cols),
                     _pick_tile_rows(rows, cols, itemsize, sub))
    return out2d.reshape(-1)[:n].reshape(orig_shape)


# Donate the input: combined with input_output_aliases the identity forward
# writes back into the caller's buffer instead of allocating a fresh output.
my_model_forward = jax.jit(_forward_impl, donate_argnums=(0,))


if __name__ == "__main__":
    key = jax.random.PRNGKey(0)
    shape, dtype = (2, 4, 16, 16), jnp.float32
    x = jax.random.normal(key, shape, dtype=dtype)

    y = jax.block_until_ready(my_model_forward(x))

    # `x` was donated; regenerate the identical reference for the check.
    x_check = jax.random.normal(key, shape, dtype=dtype)

    assert y.shape == shape
    assert y.dtype == dtype
    assert bool(jnp.allclose(y, x_check)), "identity kernel mismatch"
    print("KERNEL_OK")
</pallas_src>

<mosaic_0001>
module attributes {stable_mosaic.version = 11 : i64} {
  func.func @_copy_kernel(%arg0: i32, %arg1: memref<1x2048xf32, #tpu.memory_space<vmem>>, %arg2: memref<1x2048xf32, #tpu.memory_space<vmem>>) attributes {dimension_semantics = [#tpu.dimension_semantics<parallel>], iteration_bounds = array<i64: 1>, scalar_prefetch = 0 : i64, scratch_operands = 0 : i64, tpu.core_type = #tpu.core_type<tc>, window_params = [{transform_indices = @transform_0, window_bounds = array<i64: 1, 2048>}, {transform_indices = @transform_1, window_bounds = array<i64: 1, 2048>}]} {
    %c0 = arith.constant 0 : index
    %c0_0 = arith.constant 0 : index
    %0 = vector.load %arg1[%c0, %c0_0] : memref<1x2048xf32, #tpu.memory_space<vmem>>, vector<1x2048xf32>
    %c0_1 = arith.constant 0 : index
    %c0_2 = arith.constant 0 : index
    %1 = vector.load %arg2[%c0_1, %c0_2] : memref<1x2048xf32, #tpu.memory_space<vmem>>, vector<1x2048xf32>
    tpu.vector_store %arg2[%c0_1, %c0_2], %0 {strides = array<i32>} : memref<1x2048xf32, #tpu.memory_space<vmem>>, vector<1x2048xf32>,
    return
  }
  func.func @transform_0(%arg0: i32) -> (i32, i32) {
    %c0_i32 = arith.constant 0 : i32
    %c0_i32_0 = arith.constant 0 : i32
    return %arg0, %c0_i32 : i32, i32
  }
  func.func @transform_1(%arg0: i32) -> (i32, i32) {
    %c0_i32 = arith.constant 0 : i32
    %c0_i32_0 = arith.constant 0 : i32
    return %arg0, %c0_i32 : i32, i32
  }
}

</mosaic_0001>

<llo_original>
// kernel: _forward_impl.1
$region0: #{_forward_impl.1}
  #allocation0 [shape = 'u32[]', space=smem, size = 0x4, offset = 0x4, fixed_abs, tag = 'smem constant byte address 0x4 - core index']
  #allocation1 [shape = 'u32[72,128]{1,0:T(1,128)}', space=vmem, size = 0x9000, scoped, tag = 'internal scratch']
  %s0 = inlined_call_operand.vmem [shape: f32[1,2048], index: 0, kind: input, shape index: {}, may-alias: {0,1}]
  %s1 = inlined_call_operand.vmem [shape: f32[1,2048], index: 1, kind: output, shape index: {}, may-alias: {0,1}]
  %s2 = sld [smem:[#allocation0]]
  $region14: #{_forward_impl.1} parent=0
    _
  %s4 = ssub.s32 1, %s2
  %s5 = scalar_select 0, %s4, %s2
  // Predicated region
  $region2: #{_forward_impl.1} parent=0 // pred_check
    _
  $region3: #{_forward_impl.1} parent=0 // pred_check_branch
    %7 = sbr.rel (0) target = $region5
  $region4: #{_forward_impl.1} parent=0 // pred_region
    _
  $region5: #{_forward_impl.1} parent=0 // pred_fallthru
    _
  %v8 = vld [vmem:[%s0] sm:$0xff]
  %v9 = vld [vmem:[%s0 + $0x8] sm:$0xff]
  %10 = vst [vmem:[%s1] sm:$0xff] %v8
  %11 = vst [vmem:[%s1 + $0x8] sm:$0xff] %v9
  // Predicated region
  $region6: #{_forward_impl.1} parent=0 // pred_check
    _
  $region7: #{_forward_impl.1} parent=0 // pred_check_branch
    %13 = sbr.rel (0) target = $region9
  $region8: #{_forward_impl.1} parent=0 // pred_region
    _
  $region9: #{_forward_impl.1} parent=0 // pred_fallthru
    _
  // Predicated region
  $region10: #{_forward_impl.1} parent=0 // pred_check
    _
  $region11: #{_forward_impl.1} parent=0 // pred_check_branch
    %15 = sbr.rel (0) target = $region13
  $region12: #{_forward_impl.1} parent=0 // pred_region
    _
  $region13: #{_forward_impl.1} parent=0 // pred_fallthru
    _

</llo_original>
